<compile_context>
chip_gen: v6e
topology: v6e:2x2x1
jax: 0.10.0
libtpu: 0.0.40
codegen_flags: <defaults>
</compile_context>

<pallas_src>
from functools import partial

import numpy as np
import jax
import jax.numpy as jnp
from jax.experimental import pallas as pl
from jax.experimental.pallas import tpu as pltpu


def _round_up(x: int, m: int) -> int:
    return ((x + m - 1) // m) * m


def _omega_for(axes_dim, theta) -> np.ndarray:
    """Concatenated per-axis frequencies, matching torch's float64 -> float32."""
    return np.concatenate([
        (1.0 / (float(theta) ** (np.arange(0, d, 2, dtype=np.float64) / d)))
        for d in axes_dim
    ]).astype(np.float32)


def _embed_nd_kernel(ids_ref, omega_ref, out_ref, *, halves):
    # ids_ref  : (1, tS, A)   raw positional ids (f32)
    # omega_ref: (1, H)       concatenated per-axis frequencies
    # out_ref  : (1, tS, 2H)  lane-concatenated [cos(angle) | sin(angle)]
    H = sum(halves)
    tS = ids_ref.shape[1]
    ids_blk = ids_ref[0]                                        # (tS, A)

    # Per-frequency position: lane h gets ids[:, axis(h)].  Built with a lane
    # iota + selects over the static segment boundaries (pure VPU; no gather,
    # no MXU, no wrapper-side HBM pass).
    lane = jax.lax.broadcasted_iota(jnp.int32, (tS, H), 1)
    pos = jnp.broadcast_to(ids_blk[:, 0:1], (tS, H))
    off = halves[0]
    for i in range(1, len(halves)):
        pos = jnp.where(lane >= off,
                        jnp.broadcast_to(ids_blk[:, i:i + 1], (tS, H)),
                        pos)
        off += halves[i]

    angle = pos * omega_ref[...]                                # (tS,H)*(1,H) bcast
    # Single lane-dense store: [cos | sin] merged on the lane dim (2H lanes).
    out_ref[0] = jnp.concatenate([jnp.cos(angle), jnp.sin(angle)], axis=-1)


def embed_nd(ids: jax.Array, theta: int, axes_dim):
    """JAX/Pallas equivalent of EmbedND.forward.

    ids: (B, S, n_axes) -> (B, S, 1, sum(axes_dim)//2, 2, 2) float32
    """
    B, S, A = ids.shape
    assert A == len(axes_dim)
    assert all(d % 2 == 0 for d in axes_dim), "The dimension must be even."
    halves = tuple(d // 2 for d in axes_dim)
    H = sum(halves)

    # Tiny (1, H) frequency table as an explicit input (one revisited block;
    # kept as an operand rather than a closed-over constant for robust lowering).
    omega = jnp.asarray(_omega_for(axes_dim, theta)).reshape(1, H)
    ids_f = ids.astype(jnp.float32)

    # ---- tiling: minimal padding, even step count, VMEM-bounded tiles -------
    S8 = _round_up(max(S, 1), 8)
    bytes_per_out_row = 2 * H * 4
    cap = (1 << 20) // bytes_per_out_row          # ~1 MiB output block
    cap = max(8, min(4096, (cap // 8) * 8))
    n_tiles = max(1, -(-S8 // cap))
    if (B * n_tiles) % 2 == 1:
        n_tiles += 1                              # even total steps -> 2-TC balance (v7x)
    tS = _round_up(-(-S8 // n_tiles), 8)
    S_pad = tS * n_tiles
    if S_pad != S:
        ids_f = jnp.pad(ids_f, ((0, 0), (0, S_pad - S), (0, 0)))

    kernel = partial(_embed_nd_kernel, halves=halves)
    cs = pl.pallas_call(
        kernel,
        out_shape=jax.ShapeDtypeStruct((B, S_pad, 2 * H), jnp.float32),
        grid_spec=pltpu.PrefetchScalarGridSpec(
            num_scalar_prefetch=0,
            grid=(B, n_tiles),
            in_specs=[
                pl.BlockSpec((1, tS, A), lambda b, si: (b, si, 0)),
                pl.BlockSpec((1, H), lambda b, si: (0, 0)),
            ],
            out_specs=pl.BlockSpec((1, tS, 2 * H), lambda b, si: (b, si, 0)),
        ),
        compiler_params=pltpu.CompilerParams(
            dimension_semantics=("parallel", "parallel")),
    )(ids_f, omega)

    c = cs[:, :S, :H]                                            # (B, S, H)
    s = cs[:, :S, H:]                                            # (B, S, H)
    # Wrapper-side 2x2 assembly (see TODO(synk) above about fusing into the
    # RoPE-apply consumer instead of materialising the 4x table).
    emb = jnp.stack([c, -s, s, c], axis=-1).reshape(B, S, H, 2, 2)
    return emb[:, :, None]                                       # (B, S, 1, H, 2, 2)


# ---------------------------- pure-JAX reference -----------------------------
def _rope_ref(pos, dim, theta):
    omega = jnp.asarray(
        (1.0 / (float(theta) ** (np.arange(0, dim, 2, dtype=np.float64) / dim))
         ).astype(np.float32))
    out = jnp.einsum('...n,d->...nd', pos, omega)
    c, s = jnp.cos(out), jnp.sin(out)
    stacked = jnp.stack([c, -s, s, c], axis=-1)
    return stacked.reshape(pos.shape[0], -1, dim // 2, 2, 2).astype(jnp.float32)


def _embed_nd_ref(ids, theta, axes_dim):
    n_axes = ids.shape[-1]
    emb = jnp.concatenate(
        [_rope_ref(ids[..., i], axes_dim[i], theta) for i in range(n_axes)],
        axis=-3)
    return emb[:, :, None]


if __name__ == "__main__":
    key = jax.random.PRNGKey(0)
    B, S = 2, 8
    axes_dim = [8, 12, 12]          # dim = 32, H = 16
    theta = 10000

    ids = jax.random.randint(key, (B, S, len(axes_dim)), 0, 64).astype(jnp.float32)

    out = embed_nd(ids, theta, axes_dim)
    out = jax.block_until_ready(out)

    ref = _embed_nd_ref(ids, theta, axes_dim)
    assert out.shape == (B, S, 1, sum(axes_dim) // 2, 2, 2), out.shape
    assert out.dtype == jnp.float32
    np.testing.assert_allclose(np.asarray(out), np.asarray(ref), rtol=1e-5, atol=1e-5)

    print("KERNEL_OK")
</pallas_src>

<mosaic_0001>
module attributes {stable_mosaic.version = 11 : i64} {
  func.func @_embed_nd_kernel(%arg0: i32, %arg1: i32, %arg2: memref<1x8x3xf32, #tpu.memory_space<vmem>>, %arg3: memref<1x16xf32, #tpu.memory_space<vmem>>, %arg4: memref<1x8x32xf32, #tpu.memory_space<vmem>>) attributes {dimension_semantics = [#tpu.dimension_semantics<parallel>, #tpu.dimension_semantics<parallel>], iteration_bounds = array<i64: 2, 1>, scalar_prefetch = 0 : i64, scratch_operands = 0 : i64, tpu.core_type = #tpu.core_type<tc>, window_params = [{transform_indices = @transform_0, window_bounds = array<i64: 1, 8, 3>}, {pipeline_mode = #tpu.pipeline_mode<synchronous>, transform_indices = @transform_1, window_bounds = array<i64: 1, 16>}, {transform_indices = @transform_2, window_bounds = array<i64: 1, 8, 32>}]} {
    %c0 = arith.constant 0 : index
    %c0_0 = arith.constant 0 : index
    %c0_1 = arith.constant 0 : index
    %0 = vector.load %arg2[%c0, %c0_0, %c0_1] : memref<1x8x3xf32, #tpu.memory_space<vmem>>, vector<1x8x3xf32>
    %1 = vector.shape_cast %0 : vector<1x8x3xf32> to vector<8x3xf32>
    %2 = tpu.iota {dimensions = array<i32: 1>} : vector<8x16xi32>
    %3 = vector.extract_strided_slice %1 {offsets = [0, 0], sizes = [8, 1], strides = [1, 1]} : vector<8x3xf32> to vector<8x1xf32>
    %4 = vector.shape_cast %3 : vector<8x1xf32> to vector<8x1xf32>
    %5 = vector.broadcast %4 : vector<8x1xf32> to vector<8x16xf32>
    %c4_i32 = arith.constant 4 : i32
    %6 = vector.broadcast %c4_i32 : i32 to vector<8x16xi32>
    %7 = arith.cmpi sge, %2, %6 : vector<8x16xi32>
    %8 = vector.extract_strided_slice %1 {offsets = [0, 1], sizes = [8, 1], strides = [1, 1]} : vector<8x3xf32> to vector<8x1xf32>
    %9 = vector.shape_cast %8 : vector<8x1xf32> to vector<8x1xf32>
    %10 = vector.broadcast %9 : vector<8x1xf32> to vector<8x16xf32>
    %11 = arith.select %7, %10, %5 : vector<8x16xi1>, vector<8x16xf32>
    %c10_i32 = arith.constant 10 : i32
    %12 = vector.broadcast %c10_i32 : i32 to vector<8x16xi32>
    %13 = arith.cmpi sge, %2, %12 : vector<8x16xi32>
    %14 = vector.extract_strided_slice %1 {offsets = [0, 2], sizes = [8, 1], strides = [1, 1]} : vector<8x3xf32> to vector<8x1xf32>
    %15 = vector.shape_cast %14 : vector<8x1xf32> to vector<8x1xf32>
    %16 = vector.broadcast %15 : vector<8x1xf32> to vector<8x16xf32>
    %17 = arith.select %13, %16, %11 : vector<8x16xi1>, vector<8x16xf32>
    %c0_2 = arith.constant 0 : index
    %c0_3 = arith.constant 0 : index
    %18 = vector.load %arg3[%c0_2, %c0_3] : memref<1x16xf32, #tpu.memory_space<vmem>>, vector<1x16xf32>
    %19 = vector.broadcast %18 : vector<1x16xf32> to vector<8x16xf32>
    %20 = arith.mulf %17, %19 : vector<8x16xf32>
    %21 = math.cos %20 : vector<8x16xf32>
    %22 = math.sin %20 : vector<8x16xf32>
    %23 = tpu.concatenate %21, %22 in 1 : vector<8x16xf32>, vector<8x16xf32> -> vector<8x32xf32>
    %c0_4 = arith.constant 0 : index
    %c0_5 = arith.constant 0 : index
    %c0_6 = arith.constant 0 : index
    %24 = vector.load %arg4[%c0_4, %c0_5, %c0_6] : memref<1x8x32xf32, #tpu.memory_space<vmem>>, vector<1x8x32xf32>
    %25 = vector.shape_cast %24 : vector<1x8x32xf32> to vector<8x32xf32>
    %26 = vector.shape_cast %23 : vector<8x32xf32> to vector<1x8x32xf32>
    tpu.vector_store %arg4[%c0_4, %c0_5, %c0_6], %26 {strides = array<i32>} : memref<1x8x32xf32, #tpu.memory_space<vmem>>, vector<1x8x32xf32>,
    return
  }
  func.func @transform_0(%arg0: i32, %arg1: i32) -> (i32, i32, i32) {
    %c0_i32 = arith.constant 0 : i32
    %c0_i32_0 = arith.constant 0 : i32
    return %arg0, %arg1, %c0_i32 : i32, i32, i32
  }
  func.func @transform_1(%arg0: i32, %arg1: i32) -> (i32, i32) {
    %c0_i32 = arith.constant 0 : i32
    %c0_i32_0 = arith.constant 0 : i32
    %c0_i32_1 = arith.constant 0 : i32
    return %c0_i32, %c0_i32_0 : i32, i32
  }
  func.func @transform_2(%arg0: i32, %arg1: i32) -> (i32, i32, i32) {
    %c0_i32 = arith.constant 0 : i32
    %c0_i32_0 = arith.constant 0 : i32
    return %arg0, %arg1, %c0_i32 : i32, i32, i32
  }
}

</mosaic_0001>

<llo_original>
// kernel: tpu_custom_call.1
$region0: #{tpu_custom_call.1}
  #allocation0 [shape = 'u32[]', space=smem, size = 0x4, offset = 0x4, fixed_abs, tag = 'smem constant byte address 0x4 - core index']
  #allocation1 [shape = 'u32[144,128]{1,0:T(1,128)}', space=vmem, size = 0x12000, scoped, tag = 'internal scratch']
  %s0 = inlined_call_operand.vmem [shape: f32[2,8,3], index: 0, kind: input, shape index: {}]
  %s1 = inlined_call_operand.vmem [shape: f32[1,16], index: 1, kind: input, shape index: {}]
  %s2 = inlined_call_operand.hbm [shape: f32[2,8,32], index: 2, kind: output, shape index: {}]
  %s3 = sld [smem:[#allocation0]]
  $region41: #{tpu_custom_call.1} parent=0
    _
  %s5 = ssub.s32 1, %s3
  %s6 = scalar_select 0, %s5, %s3
  $region1: #{tpu_custom_call.1} parent=0
    #allocation2 [shape = 'u8[8192]{0}', space=vmem, size = 0x2000, scoped, tag = 'output window, operand 0']
    #allocation3 [shape = 's32[2]{0}', space=sflag, size = 0x8, scoped, tag = 'scoped memory for tpu_custom_call.1']
    %7 = vsyncpa [#allocation3], 0
    %s8 = scalar_lea.sflag [#allocation3], 1
    %9 = vsyncpa %s8, 0
    loop: start=0, step=1, limit=4
    $region2: #{tpu_custom_call.1} parent=1 // loop_pre_header
      _
    $region3: #{tpu_custom_call.1} parent=1 // loop_header
      %s11 = sphi 0, %s15
      %p12 = scmp.ge.s32.totalorder %s11, 4
      %s18 = sphi 0, %s30
      %s19 = sphi 0, %s26
      %s20 = sphi 0, %s18
      %s21 = sphi 0, %s19
      %s22 = sphi 0, %s20
      %s23 = sphi 0, %s21
      %s35 = sphi 0, %s37
      %s38 = sphi 0, %s35
      %s39 = sphi 0, %s38
      %s55 = sphi 0, %s39
      %s59 = sphi 0, %s59
      %s61 = sphi 0, %s59
      %s62 = sphi 0, %s61
      %s76 = sphi 0, %s62
      %s84 = sphi 0, %s86
      %s87 = sphi 0, %s84
      %s88 = sphi 0, %s87
      %s104 = sphi 0, %s88
    $region4: #{tpu_custom_call.1} parent=1 // loop_header_branch
      %14 = sbr.rel (%p12) target = $region8
    $region5: #{tpu_custom_call.1} parent=1 // loop_body
      %s16 = ssub.s32 %s11, 1
      %s17 = ssub.s32 %s11, 2
      %s24 = sadd.s32 1, %s19
      %p25 = scmp.ge.s32.totalorder %s24, 1
      %s26 = scalar_select %p25, 0, %s24
      %s27 = sadd.s32 1, %s18
      %s28 = scalar_select %p25, %s27, %s18
      %p29 = scmp.ge.s32.totalorder %s28, 2
      %s30 = scalar_select %p29, 0, %s28
      %s31 = ssub.s32 %s18, %s30
      %s32 = ssub.s32 %s19, %s26
      %s33 = sor.u32 %s31, %s32
      %p34 = scmp.eq.s32.totalorder %s33, 0
      %s36 = sadd.s32 %s35, 1
      %s37 = scalar_select %p34, %s35, %s36
      %p40 = pneg %p34
      %p41 = scmp.eq.s32.totalorder %s11, 1
      %p42 = por %p40, %p41
      %p43 = scmp.ne.s32.totalorder %s35, %s38
      %p44 = scmp.eq.s32.totalorder %s11, 0
      %p45 = por %p43, %p44
      %p46 = scmp.ne.s32.totalorder %s35, %s38
      %p47 = scmp.eq.s32.totalorder %s16, 1
      %p48 = por %p46, %p47
      %p49 = scmp.ne.s32.totalorder %s38, %s39
      %p50 = scmp.eq.s32.totalorder %s16, 0
      %p51 = por %p49, %p50
      %p52 = scmp.ne.s32.totalorder %s38, %s39
      %p53 = scmp.eq.s32.totalorder %s17, 1
      %p54 = por %p52, %p53
      %p56 = scmp.ne.s32.totalorder %s39, %s55
      %p57 = scmp.eq.s32.totalorder %s17, 0
      %p58 = por %p56, %p57
      %s60 = sadd.s32 %s59, 1
      %p63 = scmp.eq.s32.totalorder %s11, 1
      %p64 = scmp.ne.s32.totalorder %s59, %s61
      %p65 = scmp.eq.s32.totalorder %s11, 0
      %p66 = por %p64, %p65
      %p67 = scmp.ne.s32.totalorder %s59, %s61
      %p68 = scmp.eq.s32.totalorder %s16, 1
      %p69 = por %p67, %p68
      %p70 = scmp.ne.s32.totalorder %s61, %s62
      %p71 = scmp.eq.s32.totalorder %s16, 0
      %p72 = por %p70, %p71
      %p73 = scmp.ne.s32.totalorder %s61, %s62
      %p74 = scmp.eq.s32.totalorder %s17, 1
      %p75 = por %p73, %p74
      %p77 = scmp.ne.s32.totalorder %s62, %s76
      %p78 = scmp.eq.s32.totalorder %s17, 0
      %p79 = por %p77, %p78
      %s80 = ssub.s32 %s18, %s30
      %s81 = ssub.s32 %s19, %s26
      %s82 = sor.u32 %s80, %s81
      %p83 = scmp.eq.s32.totalorder %s82, 0
      %s85 = sadd.s32 %s84, 1
      %s86 = scalar_select %p83, %s84, %s85
      %p89 = pneg %p83
      %p90 = scmp.eq.s32.totalorder %s11, 1
      %p91 = por %p89, %p90
      %p92 = scmp.ne.s32.totalorder %s84, %s87
      %p93 = scmp.eq.s32.totalorder %s11, 0
      %p94 = por %p92, %p93
      %p95 = scmp.ne.s32.totalorder %s84, %s87
      %p96 = scmp.eq.s32.totalorder %s16, 1
      %p97 = por %p95, %p96
      %p98 = scmp.ne.s32.totalorder %s87, %s88
      %p99 = scmp.eq.s32.totalorder %s16, 0
      %p100 = por %p98, %p99
      %p101 = scmp.ne.s32.totalorder %s87, %s88
      %p102 = scmp.eq.s32.totalorder %s17, 1
      %p103 = por %p101, %p102
      %p105 = scmp.ne.s32.totalorder %s88, %s104
      %p106 = scmp.eq.s32.totalorder %s17, 0
      %p107 = por %p105, %p106
      %p108 = scmp.le.s32.totalorder 1, %s11
      %p109 = scmp.lt.s32.totalorder %s11, 3
      %p110 = pnand %p108, %p109
      %p111 = pneg %p110
      // Predicated region
      $region9: #{tpu_custom_call.1} parent=5 // pred_check
        _
      $region10: #{tpu_custom_call.1} parent=5 // pred_check_branch
        %113 = sbr.rel (%p110) target = $region12
      $region11: #{tpu_custom_call.1} parent=5 // pred_region
        %s114 = ssub.s32 %s11, 1
        // Predicated region
        $region13: #{tpu_custom_call.1} parent=11 // pred_check
          %p115 = pneg %p72
        $region14: #{tpu_custom_call.1} parent=11 // pred_check_branch
          %117 = sbr.rel (%p115) target = $region16
        $region15: #{tpu_custom_call.1} parent=11 // pred_region
          _
        $region16: #{tpu_custom_call.1} parent=11 // pred_fallthru
          _
      $region12: #{tpu_custom_call.1} parent=5 // pred_fallthru
        _
      %p118 = scmp.lt.s32.totalorder %s11, 2
      // Predicated region
      $region17: #{tpu_custom_call.1} parent=5 // pred_check
        %p119 = pneg %p118
      $region18: #{tpu_custom_call.1} parent=5 // pred_check_branch
        %121 = sbr.rel (%p119) target = $region20
      $region19: #{tpu_custom_call.1} parent=5 // pred_region
        // Predicated region
        $region21: #{tpu_custom_call.1} parent=19 // pred_check
          %p122 = pneg %p45
        $region22: #{tpu_custom_call.1} parent=19 // pred_check_branch
          %124 = sbr.rel (%p122) target = $region24
        $region23: #{tpu_custom_call.1} parent=19 // pred_region
          %p125 = scmp.lt.s32.totalorder %s18, 1
          %s126 = scalar_select %p125, %s18, 1
          %p127 = scmp.lt.s32.totalorder %s19, 0
          %s128 = scalar_select %p127, %s19, 0
          %s129 = sadd.s32 %s128, %s126
          %s130 = smul.addr %s129, 8
          %s131 = scalar_lea.vmem %s0, %s130
        $region24: #{tpu_custom_call.1} parent=19 // pred_fallthru
          _
      $region20: #{tpu_custom_call.1} parent=5 // pred_fallthru
        _
      %p132 = scmp.le.s32.totalorder 1, %s11
      %p133 = scmp.lt.s32.totalorder %s11, 3
      %p134 = pnand %p132, %p133
      %p135 = pneg %p134
      // Predicated region
      $region25: #{tpu_custom_call.1} parent=5 // pred_check
        _
      $region26: #{tpu_custom_call.1} parent=5 // pred_check_branch
        %137 = sbr.rel (%p134) target = $region28
      $region27: #{tpu_custom_call.1} parent=5 // pred_region
        %s138 = ssub.s32 %s11, 1
        %p139 = scmp.lt.s32.totalorder %s20, 1
        %s140 = scalar_select %p139, %s20, 1
        %p141 = scmp.lt.s32.totalorder %s21, 0
        %s142 = scalar_select %p141, %s21, 0
        %s143 = sadd.s32 %s142, %s140
        %s144 = smul.addr %s143, 8
        %s145 = scalar_lea.vmem %s0, %s144
        %p146 = pneg %p51
        %p147 = pneg %p48
        %p148 = pneg %p72
        %p149 = pneg %p69
        %p150 = pneg %p100
        %p151 = pneg %p97
        %s152 = sand.u32 %s87, 1
        %s153 = scalar_lea.sflag [#allocation3], %s152
        %s154 = sand.u32 %s87, 1
        %s155 = smul.addr %s154, 8
        %s156 = scalar_lea.vmem [#allocation2], %s155
        %p157 = scmp.lt.s32.totalorder %s20, 1
        %s158 = scalar_select %p157, %s20, 1
        %p159 = scmp.lt.s32.totalorder %s21, 0
        %s160 = scalar_select %p159, %s21, 0
        %s161 = sadd.s32 %s160, %s158
        %s162 = smul.addr %s161, 8
        %s163 = scalar_lea.vmem %s0, %s162
        %v164 = vld [vmem:[%s163] sm:$0xff]
        %v165 = vlaneseq
        %v166 = vand.u32 %v165, 127
        %168 = vset.pattern.permute.xlu0 0
        %169 = vperm.xlu0 %168, %v164
        %v170 = vpop.permute.xlu0 %169
        %vm172 = vcmp.ge.s32.totalorder %v166, 4
        %173 = vset.pattern.permute.xlu0 1
        %174 = vperm.xlu0 %173, %v164
        %v175 = vpop.permute.xlu0 %174
        %v177 = vsel %vm172, %v175, %v170
        %vm178 = vcmp.ge.s32.totalorder %v166, 10
        %179 = vset.pattern.permute.xlu0 2
        %180 = vperm.xlu0 %179, %v164
        %v181 = vpop.permute.xlu0 %180
        %v183 = vsel %vm178, %v181, %v177
        %v184 = vld [vmem:[%s1] sm:$0x1]
        %v186 = vlaneseq
        %v187 = vshrl.u32 %v186, 7
        %v188 = vsub.s32 0, %v187
        %v189 = vrot.slane %v184, %v188
        %v191 = vmul.f32 %v183, %v189
        %v192 = vand.u32 2147483647, %v191
        %vm193 = vcmp.le.f32.partialorder %v192, 0.7853982
        %vm194 = vcmp.lt.s32.totalorder %v191, 0
        %v195 = vand.u32 %v191, 2139095040
        %v196 = vshrl.u32 %v195, 23
        %v197 = vsub.s32 %v196, 127
        %v198 = vand.u32 2147483647, %v191
        %v199 = vand.u32 %v198, 8388607
        %v200 = vor.u32 %v199, 8388608
        %v201 = vsub.s32 0, %v200
        %v202 = vadd.s32 %v197, 1
        %vm203 = vcmp.gt.s32.totalorder %v202, 0
        %v204 = vsel %vm203, %v202, 0
        %v205 = vshrl.u32 %v204, 5
        %v206 = vand.u32 %v204, 31
        %v207 = vsub.s32 32, %v206
        %v208 = vshrl.u32 683565275, %v207
        %v209 = vshll.u32 683565275, %v206
        %v210 = vshrl.u32 2475754826, %v207
        %v211 = vor.u32 %v209, %v210
        %v212 = vshll.u32 2475754826, %v206
        %v213 = vshrl.u32 2131351028, %v207
        %v214 = vor.u32 %v212, %v213
        %v215 = vshll.u32 2131351028, %v206
        %v216 = vshrl.u32 2102212464, %v207
        %v217 = vor.u32 %v215, %v216
        %v218 = vshll.u32 2102212464, %v206
        %v219 = vshrl.u32 920167782, %v207
        %v220 = vor.u32 %v218, %v219
        %v221 = vshll.u32 920167782, %v206
        %v222 = vshrl.u32 1326507024, %v207
        %v223 = vor.u32 %v221, %v222
        %vm224 = vcmp.lt.s32.totalorder %v205, 1
        %vm225 = vcmp.lt.s32.totalorder %v205, 2
        %vm226 = vcmp.lt.s32.totalorder %v205, 3
        %vm227 = vcmp.lt.s32.totalorder %v205, 4
        %v228 = vsel %vm224, %v208, %v211
        %v229 = vsel %vm227, %v217, 2102212464
        %v230 = vsel %vm226, %v214, %v229
        %v231 = vsel %vm225, %v228, %v230
        %v232 = vsel %vm224, %v211, %v214
        %v233 = vsel %vm227, %v220, 920167782
        %v234 = vsel %vm226, %v217, %v233
        %v235 = vsel %vm225, %v232, %v234
        %v236 = vsel %vm224, %v214, %v217
        %v237 = vsel %vm227, %v223, 1326507024
        %v238 = vsel %vm226, %v220, %v237
        %v239 = vsel %vm225, %v236, %v238
        %v240 = vshll.u32 %v200, 8
        %v241 = vmul.u32.u64.compose %v240, %v239
        %v242 = vextract.low.u32 %v241
        %v243 = vextract.high.u32 %v241
        %v244 = vmul.u32.u64.compose %v240, %v235
        %v245 = vextract.low.u32 %v244
        %v246 = vextract.high.u32 %v244
        %v247 = vmul.u32 %v240, %v231
        %v248 = vadd.s32 %v243, %v245
        %vm249 = vc.u32 %v243, %v245
        %v250 = vadd.s32 %v246, 1
        %v251 = vsel %vm249, %v250, %v246
        %v252 = vadd.s32 %v247, %v251
        %v253 = vadd.s32 %v252, 536870912
        %v254 = vshrl.u32 %v253, 30
        %v255 = vshll.u32 %v254, 30
        %v256 = vsub.s32 %v252, %v255
        %vm257 = vcmp.lt.s32.totalorder %v256, 0
        %v258 = vsub.s32 0, %v256
        %v259 = vsel %vm257, %v258, %v256
        %v260 = vclz %v259
        %v261 = vsub.s32 %v260, 2
        %vm262 = vcmp.gt.s32.totalorder 0, %v261
        %v263 = vsel %vm262, 0, %v261
        %v264 = vsub.s32 32, %v263
        %v265 = vshll.u32 %v256, %v263
        %v266 = vshrl.u32 %v248, %v264
        %v267 = vor.u32 %v265, %v266
        %v268 = vsub.s32 4294967266, %v263
        %v269 = vadd.s32 %v268, 127
        %v270 = vshll.u32 %v269, 23
        %v271 = vor.u32 4788187, %v270
        %v272 = vand.u32 2147483647, %v271
        %v274 = vcvt.s32.f32 %v267
        %v275 = vmul.f32 %v274, %v272
        %v276 = vxor.u32 %v275, 2147483648
        %v277 = vsel %vm194, %v276, %v275
        %v278 = vsub.s32 4, %v254
        %v279 = vsel %vm194, %v278, %v254
        %v280 = vsel %vm193, %v191, %v277
        %v281 = vsel %vm193, 0, %v279
        %v282 = vcosq.f32.pop %v280
        %v283 = vsinq.f32.pop %v280
        %vm284 = vweird.f32 %v191
        %v285 = vand.u32 %v281, 3
        %vm286 = vcmp.lt.s32.totalorder %v285, 2
        %vm287 = vcmp.eq.s32.totalorder %v285, 0
        %v288 = vxor.u32 %v283, 2147483648
        %v289 = vsel %vm287, %v282, %v288
        %vm290 = vcmp.eq.s32.totalorder %v285, 2
        %v291 = vxor.u32 %v282, 2147483648
        %v292 = vsel %vm290, %v291, %v283
        %v293 = vsel %vm286, %v289, %v292
        %v294 = vsel %vm284, nan, %v293
        %v295 = vand.u32 2147483647, %v191
        %vm296 = vcmp.le.f32.partialorder %v295, 0.7853982
        %vm297 = vcmp.lt.s32.totalorder %v191, 0
        %v298 = vand.u32 %v191, 2139095040
        %v299 = vshrl.u32 %v298, 23
        %v300 = vsub.s32 %v299, 127
        %v301 = vand.u32 2147483647, %v191
        %v302 = vand.u32 %v301, 8388607
        %v303 = vor.u32 %v302, 8388608
        %v304 = vsub.s32 0, %v303
        %v305 = vadd.s32 %v300, 1
        %vm306 = vcmp.gt.s32.totalorder %v305, 0
        %v307 = vsel %vm306, %v305, 0
        %v308 = vshrl.u32 %v307, 5
        %v309 = vand.u32 %v307, 31
        %v310 = vsub.s32 32, %v309
        %v311 = vshrl.u32 683565275, %v310
        %v312 = vshll.u32 683565275, %v309
        %v313 = vshrl.u32 2475754826, %v310
        %v314 = vor.u32 %v312, %v313
        %v315 = vshll.u32 2475754826, %v309
        %v316 = vshrl.u32 2131351028, %v310
        %v317 = vor.u32 %v315, %v316
        %v318 = vshll.u32 2131351028, %v309
        %v319 = vshrl.u32 2102212464, %v310
        %v320 = vor.u32 %v318, %v319
        %v321 = vshll.u32 2102212464, %v309
        %v322 = vshrl.u32 920167782, %v310
        %v323 = vor.u32 %v321, %v322
        %v324 = vshll.u32 920167782, %v309
        %v325 = vshrl.u32 1326507024, %v310
        %v326 = vor.u32 %v324, %v325
        %vm327 = vcmp.lt.s32.totalorder %v308, 1
        %vm328 = vcmp.lt.s32.totalorder %v308, 2
        %vm329 = vcmp.lt.s32.totalorder %v308, 3
        %vm330 = vcmp.lt.s32.totalorder %v308, 4
        %v331 = vsel %vm327, %v311, %v314
        %v332 = vsel %vm330, %v320, 2102212464
        %v333 = vsel %vm329, %v317, %v332
        %v334 = vsel %vm328, %v331, %v333
        %v335 = vsel %vm327, %v314, %v317
        %v336 = vsel %vm330, %v323, 920167782
        %v337 = vsel %vm329, %v320, %v336
        %v338 = vsel %vm328, %v335, %v337
        %v339 = vsel %vm327, %v317, %v320
        %v340 = vsel %vm330, %v326, 1326507024
        %v341 = vsel %vm329, %v323, %v340
        %v342 = vsel %vm328, %v339, %v341
        %v343 = vshll.u32 %v303, 8
        %v344 = vmul.u32.u64.compose %v343, %v342
        %v345 = vextract.low.u32 %v344
        %v346 = vextract.high.u32 %v344
        %v347 = vmul.u32.u64.compose %v343, %v338
        %v348 = vextract.low.u32 %v347
        %v349 = vextract.high.u32 %v347
        %v350 = vmul.u32 %v343, %v334
        %v351 = vadd.s32 %v346, %v348
        %vm352 = vc.u32 %v346, %v348
        %v353 = vadd.s32 %v349, 1
        %v354 = vsel %vm352, %v353, %v349
        %v355 = vadd.s32 %v350, %v354
        %v356 = vadd.s32 %v355, 536870912
        %v357 = vshrl.u32 %v356, 30
        %v358 = vshll.u32 %v357, 30
        %v359 = vsub.s32 %v355, %v358
        %vm360 = vcmp.lt.s32.totalorder %v359, 0
        %v361 = vsub.s32 0, %v359
        %v362 = vsel %vm360, %v361, %v359
        %v363 = vclz %v362
        %v364 = vsub.s32 %v363, 2
        %vm365 = vcmp.gt.s32.totalorder 0, %v364
        %v366 = vsel %vm365, 0, %v364
        %v367 = vsub.s32 32, %v366
        %v368 = vshll.u32 %v359, %v366
        %v369 = vshrl.u32 %v351, %v367
        %v370 = vor.u32 %v368, %v369
        %v371 = vsub.s32 4294967266, %v366
        %v372 = vadd.s32 %v371, 127
        %v373 = vshll.u32 %v372, 23
        %v374 = vor.u32 4788187, %v373
        %v375 = vand.u32 2147483647, %v374
        %v377 = vcvt.s32.f32 %v370
        %v378 = vmul.f32 %v377, %v375
        %v379 = vxor.u32 %v378, 2147483648
        %v380 = vsel %vm297, %v379, %v378
        %v381 = vsub.s32 4, %v357
        %v382 = vsel %vm297, %v381, %v357
        %v383 = vsel %vm296, %v191, %v380
        %v384 = vsel %vm296, 0, %v382
        %v385 = vcosq.f32.pop %v383
        %v386 = vsinq.f32.pop %v383
        %vm387 = vweird.f32 %v191
        %v388 = vadd.s32 %v384, 3
        %v389 = vand.u32 %v388, 3
        %vm390 = vcmp.lt.s32.totalorder %v389, 2
        %vm391 = vcmp.eq.s32.totalorder %v389, 0
        %v392 = vxor.u32 %v386, 2147483648
        %v393 = vsel %vm391, %v385, %v392
        %vm394 = vcmp.eq.s32.totalorder %v389, 2
        %v395 = vxor.u32 %v385, 2147483648
        %v396 = vsel %vm394, %v395, %v386
        %v397 = vsel %vm390, %v393, %v396
        %v398 = vsel %vm387, nan, %v397
        %400 = vrot.lane.b32.xlu0 %v398, 16
        %v401 = vpop.permute.xlu0 %400
        %vm403 = vcmask 130048
        %v404 = vsel %vm403, %v294, %v401
        %vm405 = vcmask 261120
        %406 = vst.msk [vmem:[%s156] sm:$0xff] %vm405, %v404
        %s407 = sand.u32 %s87, 1
        %s408 = scalar_lea.sflag [#allocation3], %s407
        %s409 = sand.u32 %s87, 1
        %s410 = smul.addr %s409, 8
        %s411 = scalar_lea.vmem [#allocation2], %s410
        // Predicated region
        $region29: #{tpu_custom_call.1} parent=27 // pred_check
          %p412 = pneg %p97
        $region30: #{tpu_custom_call.1} parent=27 // pred_check_branch
          %414 = sbr.rel (%p412) target = $region32
        $region31: #{tpu_custom_call.1} parent=27 // pred_region
          %s416 = ssub.s32 128, 128
          %417 = vsyncadd %s408, %s416
          %s418 = sadd.s32 %s21, %s20
          %s419 = smul.addr %s418, 128
          %s420 = scalar_lea.hbm %s2, %s419
          %s422 = sshll.u32 %s411, 4
          %s423 = int_to_ptr.vmem [resolvable:$true] %s422
          %425 = dma.vmem_to_hbm [thread:$0]  %s423, 128, %s420, %s408
        $region32: #{tpu_custom_call.1} parent=27 // pred_fallthru
          _
      $region28: #{tpu_custom_call.1} parent=5 // pred_fallthru
        _
      %p426 = scmp.le.s32.totalorder 2, %s11
      // Predicated region
      $region33: #{tpu_custom_call.1} parent=5 // pred_check
        %p427 = pneg %p426
      $region34: #{tpu_custom_call.1} parent=5 // pred_check_branch
        %429 = sbr.rel (%p427) target = $region36
      $region35: #{tpu_custom_call.1} parent=5 // pred_region
        %s430 = ssub.s32 %s11, 2
        // Predicated region
        $region37: #{tpu_custom_call.1} parent=35 // pred_check
          %p431 = pneg %p103
        $region38: #{tpu_custom_call.1} parent=35 // pred_check_branch
          %433 = sbr.rel (%p431) target = $region40
        $region39: #{tpu_custom_call.1} parent=35 // pred_region
          %s434 = sand.u32 %s88, 1
          %s435 = scalar_lea.sflag [#allocation3], %s434
          %s436 = sand.u32 %s88, 1
          %s437 = smul.addr %s436, 8
          %s438 = scalar_lea.vmem [#allocation2], %s437
          %439 = dma.done %s435, 128
        $region40: #{tpu_custom_call.1} parent=35 // pred_fallthru
          _
      $region36: #{tpu_custom_call.1} parent=5 // pred_fallthru
        _
    $region6: #{tpu_custom_call.1} parent=1 // loop_footer
      %s15 = sadd.s32 1, %s11
    $region7: #{tpu_custom_call.1} parent=1 // loop_footer_branch
      %10 = sbr.rel target = $region3
    $region8: #{tpu_custom_call.1} parent=1 // loop_exit
      _
    %440 = vsyncpa [#allocation3], 1
    %s441 = scalar_lea.sflag [#allocation3], 1
    %442 = vsyncpa %s441, 1

</llo_original>
